<compile_context>
chip_gen: v7x
topology: tpu7x:2x2x1
jax: 0.10.0
libtpu: 0.0.40
codegen_flags: <defaults>
</compile_context>

<pallas_src>
import functools

import jax
import jax.numpy as jnp
from jax.experimental import pallas as pl
from jax.experimental.pallas import tpu as pltpu


def _tensorcores_per_chip() -> int:
    """Best-effort TensorCores-per-chip count (v7x / v4 / v5p have 2)."""
    try:
        kind = jax.devices()[0].device_kind.lower()
    except Exception:
        return 1
    if any(tag in kind for tag in ("v7", "tpu7", "v4", "v5p")):
        return 2
    return 1


def mla_projection_kernel(x_ref, dw_ref, pw_ref, o_ref, *, H, W, K):
    # x_ref : (bn, C, L)    flat zero-padded input, L = H*W + 2*p*(W+1)
    # dw_ref: (K*K, C, 1)   depthwise taps, dw[ky*K+kx, c, 0] = w_dw[c, 0, ky, kx]
    # pw_ref: (C, C)        dense block-diagonal grouped-1x1 weight (transposed)
    # o_ref : (bn, C, H*W)  lane-dense output
    HW = H * W
    p = K // 2
    bn = x_ref.shape[0]
    C = x_ref.shape[1]

    # Per-lane width coordinate + per-kx width-edge masks, hoisted once
    # (shared across the batch loop and all ky).
    col = jax.lax.broadcasted_iota(jnp.int32, (1, HW), 1)
    w_idx = jax.lax.rem(col, W)
    masks = []
    for kx in range(K):
        sx = kx - p
        if sx == 0:
            masks.append(None)
        else:
            valid = jnp.logical_and(w_idx + sx >= 0, w_idx + sx < W)
            masks.append(valid.astype(jnp.float32))

    for n in range(bn):
        # One (possibly misaligned) lane slice per ky at the centre-tap offset;
        # the other kx taps are XLU rolls of it.  Lanes the circular roll wraps
        # are exactly the lanes zeroed by masks[kx] below.
        centers = [
            x_ref[n, :, ky * W + p: ky * W + p + HW].astype(jnp.float32)
            for ky in range(K)
        ]

        # Depthwise KxK "same" conv, accumulated in f32 as (C, HW).
        acc = jnp.zeros((C, HW), jnp.float32)
        for kx in range(K):
            sx = kx - p
            shift = (-sx) % HW  # jnp.roll semantics: out[i] = in[i + sx]
            part = jnp.zeros((C, HW), jnp.float32)
            for ky in range(K):
                xs = centers[ky] if sx == 0 else pltpu.roll(centers[ky], shift, 1)
                part = part + dw_ref[ky * K + kx].astype(jnp.float32) * xs
            if masks[kx] is not None:
                # Width-edge correction: must be applied per-kx BEFORE the
                # cross-kx sum (also zeroes the roll's wrapped lanes).
                part = part * masks[kx]
            acc = acc + part

        # Grouped 1x1 conv as one MXU matmul: (C_out, C_in) @ (C_in, HW),
        # spatial dim on the lane/N axis.  MXU runs in the weight dtype
        # (bf16 models stay bf16) with an f32 accumulator.
        y = jnp.dot(pw_ref[...], acc.astype(pw_ref.dtype),
                    preferred_element_type=jnp.float32)
        o_ref[n] = y.astype(o_ref.dtype)


@functools.partial(jax.jit, static_argnames=("num_attention_heads",))
def mla_projection(x_nchw, w_dw, w_pw, num_attention_heads):
    """Forward pass of MLAProjection.

    x_nchw: (N, 3*in_channels, H, W)
    w_dw  : (C, 1, K, K)    depthwise proj_in weight (OIHW, groups=C, bias=False)
    w_pw  : (C, C//G, 1, 1) grouped proj_out weight, G = 3*num_attention_heads
    """
    N, C, H, W = x_nchw.shape
    K = w_dw.shape[-1]
    p = K // 2
    groups = 3 * num_attention_heads
    m = C // groups
    HW = H * W
    P = p * (W + 1)            # fused pad amount per end of the flat axis
    L = HW + 2 * P             # flat padded spatial length

    # ---- glue (plain JAX, layout plumbing only) ----
    # Single fused pad: p*(W+1) zeros at each end of the row-major flat axis
    # is bit-identical to height-pad-then-flat-pad, in one HBM pass.
    xflat = jnp.pad(x_nchw.reshape(N, C, HW), ((0, 0), (0, 0), (P, P)))

    # Depthwise taps as (K*K, C, 1) for cheap (C,1) lane broadcasts in-kernel.
    dw = jnp.transpose(w_dw[:, 0].reshape(C, K * K), (1, 0))[..., None]

    # Grouped 1x1 conv as a dense block-diagonal (C_out, C_in) matrix, built
    # vectorized.  Fine at C=12; see TODO(synk) above for production C.
    blocks = w_pw[:, :, 0, 0].reshape(groups, m, m)
    pw_t = jnp.einsum("gab,gh->gahb", blocks,
                      jnp.eye(groups, dtype=w_pw.dtype)).reshape(C, C)

    # Grid: per-sample "parallel" only when the chip has >1 TensorCore;
    # otherwise one grid step over the whole (tiny) batch.
    nb = N if (_tensorcores_per_chip() >= 2 and N > 1) else 1
    bn = N // nb

    # Advisory cost estimate so XLA can overlap the pad/reshape with the call.
    flops = 2 * N * C * HW * (K * K + m)
    bytes_accessed = int(
        N * C * (L + HW) * jnp.dtype(x_nchw.dtype).itemsize
        + (K * K * C + C * C) * jnp.dtype(w_dw.dtype).itemsize)

    # ---- Pallas hot path ----
    out_flat = pl.pallas_call(
        functools.partial(mla_projection_kernel, H=H, W=W, K=K),
        out_shape=jax.ShapeDtypeStruct((N, C, HW), x_nchw.dtype),
        grid=(nb,),
        in_specs=[
            pl.BlockSpec((bn, C, L), lambda b: (b, 0, 0)),
            pl.BlockSpec((K * K, C, 1), lambda b: (0, 0, 0)),
            pl.BlockSpec((C, C), lambda b: (0, 0)),
        ],
        out_specs=pl.BlockSpec((bn, C, HW), lambda b: (b, 0, 0)),
        compiler_params=pltpu.CompilerParams(
            dimension_semantics=("parallel",)),
        cost_estimate=pl.CostEstimate(
            flops=flops, transcendentals=0, bytes_accessed=bytes_accessed),
    )(xflat, dw, pw_t)

    return out_flat.reshape(N, C, H, W)    # free reshape, already NCHW


def ref_forward(x_nchw, w_dw, w_pw, K, groups_out):
    """Pure-JAX reference matching PyTorch Conv2d semantics (bias=False)."""
    p = K // 2
    y = jax.lax.conv_general_dilated(
        x_nchw, w_dw, window_strides=(1, 1), padding=[(p, p), (p, p)],
        dimension_numbers=("NCHW", "OIHW", "NCHW"),
        feature_group_count=w_dw.shape[0])
    y = jax.lax.conv_general_dilated(
        y, w_pw, window_strides=(1, 1), padding="VALID",
        dimension_numbers=("NCHW", "OIHW", "NCHW"),
        feature_group_count=groups_out)
    return y


if __name__ == "__main__":
    # module config (small, consistent with the PyTorch __init__)
    in_channels = 4
    num_attention_heads = 2
    kernel_size = 3

    C = 3 * in_channels                 # 12 total channels
    groups = 3 * num_attention_heads    # 6 groups for proj_out
    m = C // groups                     # 2 channels per group
    N, H, W = 2, 16, 16

    key = jax.random.PRNGKey(0)
    k1, k2, k3 = jax.random.split(key, 3)
    x = jax.random.normal(k1, (N, C, H, W), dtype=jnp.float32)
    # deterministic synthetic weights (same shapes as the nn.Conv2d params)
    w_dw = 0.1 * jax.random.normal(k2, (C, 1, kernel_size, kernel_size),
                                   dtype=jnp.float32)
    w_pw = 0.1 * jax.random.normal(k3, (C, m, 1, 1), dtype=jnp.float32)

    out = mla_projection(x, w_dw, w_pw,
                         num_attention_heads=num_attention_heads)
    out = jax.block_until_ready(out)

    ref = ref_forward(x, w_dw, w_pw, kernel_size, groups)
    assert out.shape == ref.shape == (N, C, H, W)
    assert out.dtype == x.dtype
    assert jnp.allclose(out, ref, atol=1e-4, rtol=1e-4), "mismatch vs reference"

    print("KERNEL_OK")
</pallas_src>

<mosaic_0001>
module attributes {stable_mosaic.version = 11 : i64} {
  func.func @mla_projection_kernel(%arg0: i32, %arg1: memref<2x12x290xf32, #tpu.memory_space<vmem>>, %arg2: memref<9x12x1xf32, #tpu.memory_space<vmem>>, %arg3: memref<12x12xf32, #tpu.memory_space<vmem>>, %arg4: memref<2x12x256xf32, #tpu.memory_space<vmem>>) attributes {dimension_semantics = [#tpu.dimension_semantics<parallel>], iteration_bounds = array<i64: 1>, scalar_prefetch = 0 : i64, scratch_operands = 0 : i64, tpu.core_type = #tpu.core_type<tc>, window_params = [{transform_indices = @transform_0, window_bounds = array<i64: 2, 12, 290>}, {pipeline_mode = #tpu.pipeline_mode<synchronous>, transform_indices = @transform_1, window_bounds = array<i64: 9, 12, 1>}, {pipeline_mode = #tpu.pipeline_mode<synchronous>, transform_indices = @transform_2, window_bounds = array<i64: 12, 12>}, {transform_indices = @transform_3, window_bounds = array<i64: 2, 12, 256>}]} {
    %0 = tpu.iota {dimensions = array<i32: 1>} : vector<1x256xi32>
    %c16_i32 = arith.constant 16 : i32
    %1 = vector.broadcast %c16_i32 : i32 to vector<1x256xi32>
    %2 = arith.remsi %0, %1 : vector<1x256xi32>
    %c-1_i32 = arith.constant -1 : i32
    %3 = vector.broadcast %c-1_i32 : i32 to vector<1x256xi32>
    %4 = arith.addi %2, %3 : vector<1x256xi32>
    %c0_i32 = arith.constant 0 : i32
    %5 = vector.broadcast %c0_i32 : i32 to vector<1x256xi32>
    %6 = arith.cmpi sge, %4, %5 : vector<1x256xi32>
    %c-1_i32_0 = arith.constant -1 : i32
    %7 = vector.broadcast %c-1_i32_0 : i32 to vector<1x256xi32>
    %8 = arith.addi %2, %7 : vector<1x256xi32>
    %c16_i32_1 = arith.constant 16 : i32
    %9 = vector.broadcast %c16_i32_1 : i32 to vector<1x256xi32>
    %10 = arith.cmpi slt, %8, %9 : vector<1x256xi32>
    %11 = arith.andi %6, %10 : vector<1x256xi1>
    %12 = arith.extui %11 : vector<1x256xi1> to vector<1x256xi32>
    %13 = arith.sitofp %12 : vector<1x256xi32> to vector<1x256xf32>
    %c1_i32 = arith.constant 1 : i32
    %14 = vector.broadcast %c1_i32 : i32 to vector<1x256xi32>
    %15 = arith.addi %2, %14 : vector<1x256xi32>
    %c0_i32_2 = arith.constant 0 : i32
    %16 = vector.broadcast %c0_i32_2 : i32 to vector<1x256xi32>
    %17 = arith.cmpi sge, %15, %16 : vector<1x256xi32>
    %c1_i32_3 = arith.constant 1 : i32
    %18 = vector.broadcast %c1_i32_3 : i32 to vector<1x256xi32>
    %19 = arith.addi %2, %18 : vector<1x256xi32>
    %c16_i32_4 = arith.constant 16 : i32
    %20 = vector.broadcast %c16_i32_4 : i32 to vector<1x256xi32>
    %21 = arith.cmpi slt, %19, %20 : vector<1x256xi32>
    %22 = arith.andi %17, %21 : vector<1x256xi1>
    %23 = arith.extui %22 : vector<1x256xi1> to vector<1x256xi32>
    %24 = arith.sitofp %23 : vector<1x256xi32> to vector<1x256xf32>
    %c0 = arith.constant 0 : index
    %c0_5 = arith.constant 0 : index
    %c1 = arith.constant 1 : index
    %25 = vector.load %arg1[%c0, %c0_5, %c1] : memref<2x12x290xf32, #tpu.memory_space<vmem>>, vector<1x12x256xf32>
    %26 = vector.shape_cast %25 : vector<1x12x256xf32> to vector<12x256xf32>
    %c0_6 = arith.constant 0 : index
    %c0_7 = arith.constant 0 : index
    %c17 = arith.constant 17 : index
    %27 = vector.load %arg1[%c0_6, %c0_7, %c17] : memref<2x12x290xf32, #tpu.memory_space<vmem>>, vector<1x12x256xf32>
    %28 = vector.shape_cast %27 : vector<1x12x256xf32> to vector<12x256xf32>
    %c0_8 = arith.constant 0 : index
    %c0_9 = arith.constant 0 : index
    %c33 = arith.constant 33 : index
    %29 = vector.load %arg1[%c0_8, %c0_9, %c33] : memref<2x12x290xf32, #tpu.memory_space<vmem>>, vector<1x12x256xf32>
    %30 = vector.shape_cast %29 : vector<1x12x256xf32> to vector<12x256xf32>
    %cst = arith.constant 0.000000e+00 : f32
    %31 = vector.broadcast %cst : f32 to vector<12x256xf32>
    %cst_10 = arith.constant 0.000000e+00 : f32
    %32 = vector.broadcast %cst_10 : f32 to vector<12x256xf32>
    %c1_i32_11 = arith.constant 1 : i32
    %33 = tpu.dynamic_rotate %26 by %c1_i32_11 dim 1 : vector<12x256xf32>, i32 -> vector<12x256xf32>
    %c0_12 = arith.constant 0 : index
    %c0_13 = arith.constant 0 : index
    %c0_14 = arith.constant 0 : index
    %34 = vector.load %arg2[%c0_12, %c0_13, %c0_14] : memref<9x12x1xf32, #tpu.memory_space<vmem>>, vector<1x12x1xf32>
    %35 = vector.shape_cast %34 : vector<1x12x1xf32> to vector<12x1xf32>
    %36 = vector.broadcast %35 : vector<12x1xf32> to vector<12x256xf32>
    %37 = arith.mulf %36, %33 : vector<12x256xf32>
    %38 = arith.addf %32, %37 : vector<12x256xf32>
    %c1_i32_15 = arith.constant 1 : i32
    %39 = tpu.dynamic_rotate %28 by %c1_i32_15 dim 1 : vector<12x256xf32>, i32 -> vector<12x256xf32>
    %c3 = arith.constant 3 : index
    %c0_16 = arith.constant 0 : index
    %c0_17 = arith.constant 0 : index
    %40 = vector.load %arg2[%c3, %c0_16, %c0_17] : memref<9x12x1xf32, #tpu.memory_space<vmem>>, vector<1x12x1xf32>
    %41 = vector.shape_cast %40 : vector<1x12x1xf32> to vector<12x1xf32>
    %42 = vector.broadcast %41 : vector<12x1xf32> to vector<12x256xf32>
    %43 = arith.mulf %42, %39 : vector<12x256xf32>
    %44 = arith.addf %38, %43 : vector<12x256xf32>
    %c1_i32_18 = arith.constant 1 : i32
    %45 = tpu.dynamic_rotate %30 by %c1_i32_18 dim 1 : vector<12x256xf32>, i32 -> vector<12x256xf32>
    %c6 = arith.constant 6 : index
    %c0_19 = arith.constant 0 : index
    %c0_20 = arith.constant 0 : index
    %46 = vector.load %arg2[%c6, %c0_19, %c0_20] : memref<9x12x1xf32, #tpu.memory_space<vmem>>, vector<1x12x1xf32>
    %47 = vector.shape_cast %46 : vector<1x12x1xf32> to vector<12x1xf32>
    %48 = vector.broadcast %47 : vector<12x1xf32> to vector<12x256xf32>
    %49 = arith.mulf %48, %45 : vector<12x256xf32>
    %50 = arith.addf %44, %49 : vector<12x256xf32>
    %51 = vector.broadcast %13 : vector<1x256xf32> to vector<12x256xf32>
    %52 = arith.mulf %50, %51 : vector<12x256xf32>
    %53 = arith.addf %31, %52 : vector<12x256xf32>
    %cst_21 = arith.constant 0.000000e+00 : f32
    %54 = vector.broadcast %cst_21 : f32 to vector<12x256xf32>
    %c1_22 = arith.constant 1 : index
    %c0_23 = arith.constant 0 : index
    %c0_24 = arith.constant 0 : index
    %55 = vector.load %arg2[%c1_22, %c0_23, %c0_24] : memref<9x12x1xf32, #tpu.memory_space<vmem>>, vector<1x12x1xf32>
    %56 = vector.shape_cast %55 : vector<1x12x1xf32> to vector<12x1xf32>
    %57 = vector.broadcast %56 : vector<12x1xf32> to vector<12x256xf32>
    %58 = arith.mulf %57, %26 : vector<12x256xf32>
    %59 = arith.addf %54, %58 : vector<12x256xf32>
    %c4 = arith.constant 4 : index
    %c0_25 = arith.constant 0 : index
    %c0_26 = arith.constant 0 : index
    %60 = vector.load %arg2[%c4, %c0_25, %c0_26] : memref<9x12x1xf32, #tpu.memory_space<vmem>>, vector<1x12x1xf32>
    %61 = vector.shape_cast %60 : vector<1x12x1xf32> to vector<12x1xf32>
    %62 = vector.broadcast %61 : vector<12x1xf32> to vector<12x256xf32>
    %63 = arith.mulf %62, %28 : vector<12x256xf32>
    %64 = arith.addf %59, %63 : vector<12x256xf32>
    %c7 = arith.constant 7 : index
    %c0_27 = arith.constant 0 : index
    %c0_28 = arith.constant 0 : index
    %65 = vector.load %arg2[%c7, %c0_27, %c0_28] : memref<9x12x1xf32, #tpu.memory_space<vmem>>, vector<1x12x1xf32>
    %66 = vector.shape_cast %65 : vector<1x12x1xf32> to vector<12x1xf32>
    %67 = vector.broadcast %66 : vector<12x1xf32> to vector<12x256xf32>
    %68 = arith.mulf %67, %30 : vector<12x256xf32>
    %69 = arith.addf %64, %68 : vector<12x256xf32>
    %70 = arith.addf %53, %69 : vector<12x256xf32>
    %cst_29 = arith.constant 0.000000e+00 : f32
    %71 = vector.broadcast %cst_29 : f32 to vector<12x256xf32>
    %c255_i32 = arith.constant 255 : i32
    %72 = tpu.dynamic_rotate %26 by %c255_i32 dim 1 : vector<12x256xf32>, i32 -> vector<12x256xf32>
    %c2 = arith.constant 2 : index
    %c0_30 = arith.constant 0 : index
    %c0_31 = arith.constant 0 : index
    %73 = vector.load %arg2[%c2, %c0_30, %c0_31] : memref<9x12x1xf32, #tpu.memory_space<vmem>>, vector<1x12x1xf32>
    %74 = vector.shape_cast %73 : vector<1x12x1xf32> to vector<12x1xf32>
    %75 = vector.broadcast %74 : vector<12x1xf32> to vector<12x256xf32>
    %76 = arith.mulf %75, %72 : vector<12x256xf32>
    %77 = arith.addf %71, %76 : vector<12x256xf32>
    %c255_i32_32 = arith.constant 255 : i32
    %78 = tpu.dynamic_rotate %28 by %c255_i32_32 dim 1 : vector<12x256xf32>, i32 -> vector<12x256xf32>
    %c5 = arith.constant 5 : index
    %c0_33 = arith.constant 0 : index
    %c0_34 = arith.constant 0 : index
    %79 = vector.load %arg2[%c5, %c0_33, %c0_34] : memref<9x12x1xf32, #tpu.memory_space<vmem>>, vector<1x12x1xf32>
    %80 = vector.shape_cast %79 : vector<1x12x1xf32> to vector<12x1xf32>
    %81 = vector.broadcast %80 : vector<12x1xf32> to vector<12x256xf32>
    %82 = arith.mulf %81, %78 : vector<12x256xf32>
    %83 = arith.addf %77, %82 : vector<12x256xf32>
    %c255_i32_35 = arith.constant 255 : i32
    %84 = tpu.dynamic_rotate %30 by %c255_i32_35 dim 1 : vector<12x256xf32>, i32 -> vector<12x256xf32>
    %c8 = arith.constant 8 : index
    %c0_36 = arith.constant 0 : index
    %c0_37 = arith.constant 0 : index
    %85 = vector.load %arg2[%c8, %c0_36, %c0_37] : memref<9x12x1xf32, #tpu.memory_space<vmem>>, vector<1x12x1xf32>
    %86 = vector.shape_cast %85 : vector<1x12x1xf32> to vector<12x1xf32>
    %87 = vector.broadcast %86 : vector<12x1xf32> to vector<12x256xf32>
    %88 = arith.mulf %87, %84 : vector<12x256xf32>
    %89 = arith.addf %83, %88 : vector<12x256xf32>
    %90 = vector.broadcast %24 : vector<1x256xf32> to vector<12x256xf32>
    %91 = arith.mulf %89, %90 : vector<12x256xf32>
    %92 = arith.addf %70, %91 : vector<12x256xf32>
    %c0_38 = arith.constant 0 : index
    %c0_39 = arith.constant 0 : index
    %93 = vector.load %arg3[%c0_38, %c0_39] : memref<12x12xf32, #tpu.memory_space<vmem>>, vector<12x12xf32>
    %cst_40 = arith.constant dense<0.000000e+00> : vector<12x256xf32>
    %94 = tpu.matmul %93, %92, %cst_40 {dimension_numbers = #tpu.dot_dimension_numbers<[1], [0], [0], [1], [0, 0, 1, 1], [], []>} : vector<12x12xf32>, vector<12x256xf32>, vector<12x256xf32> -> vector<12x256xf32>
    %c0_41 = arith.constant 0 : index
    %c0_42 = arith.constant 0 : index
    %c0_43 = arith.constant 0 : index
    %95 = vector.load %arg4[%c0_41, %c0_42, %c0_43] : memref<2x12x256xf32, #tpu.memory_space<vmem>>, vector<1x12x256xf32>
    %96 = vector.shape_cast %95 : vector<1x12x256xf32> to vector<12x256xf32>
    %97 = vector.shape_cast %94 : vector<12x256xf32> to vector<1x12x256xf32>
    tpu.vector_store %arg4[%c0_41, %c0_42, %c0_43], %97 {strides = array<i32>} : memref<2x12x256xf32, #tpu.memory_space<vmem>>, vector<1x12x256xf32>,
    %c1_44 = arith.constant 1 : index
    %c0_45 = arith.constant 0 : index
    %c1_46 = arith.constant 1 : index
    %98 = vector.load %arg1[%c1_44, %c0_45, %c1_46] : memref<2x12x290xf32, #tpu.memory_space<vmem>>, vector<1x12x256xf32>
    %99 = vector.shape_cast %98 : vector<1x12x256xf32> to vector<12x256xf32>
    %c1_47 = arith.constant 1 : index
    %c0_48 = arith.constant 0 : index
    %c17_49 = arith.constant 17 : index
    %100 = vector.load %arg1[%c1_47, %c0_48, %c17_49] : memref<2x12x290xf32, #tpu.memory_space<vmem>>, vector<1x12x256xf32>
    %101 = vector.shape_cast %100 : vector<1x12x256xf32> to vector<12x256xf32>
    %c1_50 = arith.constant 1 : index
    %c0_51 = arith.constant 0 : index
    %c33_52 = arith.constant 33 : index
    %102 = vector.load %arg1[%c1_50, %c0_51, %c33_52] : memref<2x12x290xf32, #tpu.memory_space<vmem>>, vector<1x12x256xf32>
    %103 = vector.shape_cast %102 : vector<1x12x256xf32> to vector<12x256xf32>
    %cst_53 = arith.constant 0.000000e+00 : f32
    %104 = vector.broadcast %cst_53 : f32 to vector<12x256xf32>
    %cst_54 = arith.constant 0.000000e+00 : f32
    %105 = vector.broadcast %cst_54 : f32 to vector<12x256xf32>
    %c1_i32_55 = arith.constant 1 : i32
    %106 = tpu.dynamic_rotate %99 by %c1_i32_55 dim 1 : vector<12x256xf32>, i32 -> vector<12x256xf32>
    %c0_56 = arith.constant 0 : index
    %c0_57 = arith.constant 0 : index
    %c0_58 = arith.constant 0 : index
    %107 = vector.load %arg2[%c0_56, %c0_57, %c0_58] : memref<9x12x1xf32, #tpu.memory_space<vmem>>, vector<1x12x1xf32>
    %108 = vector.shape_cast %107 : vector<1x12x1xf32> to vector<12x1xf32>
    %109 = vector.broadcast %108 : vector<12x1xf32> to vector<12x256xf32>
    %110 = arith.mulf %109, %106 : vector<12x256xf32>
    %111 = arith.addf %105, %110 : vector<12x256xf32>
    %c1_i32_59 = arith.constant 1 : i32
    %112 = tpu.dynamic_rotate %101 by %c1_i32_59 dim 1 : vector<12x256xf32>, i32 -> vector<12x256xf32>
    %c3_60 = arith.constant 3 : index
    %c0_61 = arith.constant 0 : index
    %c0_62 = arith.constant 0 : index
    %113 = vector.load %arg2[%c3_60, %c0_61, %c0_62] : memref<9x12x1xf32, #tpu.memory_space<vmem>>, vector<1x12x1xf32>
    %114 = vector.shape_cast %113 : vector<1x12x1xf32> to vector<12x1xf32>
    %115 = vector.broadcast %114 : vector<12x1xf32> to vector<12x256xf32>
    %116 = arith.mulf %115, %112 : vector<12x256xf32>
    %117 = arith.addf %111, %116 : vector<12x256xf32>
    %c1_i32_63 = arith.constant 1 : i32
    %118 = tpu.dynamic_rotate %103 by %c1_i32_63 dim 1 : vector<12x256xf32>, i32 -> vector<12x256xf32>
    %c6_64 = arith.constant 6 : index
    %c0_65 = arith.constant 0 : index
    %c0_66 = arith.constant 0 : index
    %119 = vector.load %arg2[%c6_64, %c0_65, %c0_66] : memref<9x12x1xf32, #tpu.memory_space<vmem>>, vector<1x12x1xf32>
    %120 = vector.shape_cast %119 : vector<1x12x1xf32> to vector<12x1xf32>
    %121 = vector.broadcast %120 : vector<12x1xf32> to vector<12x256xf32>
    %122 = arith.mulf %121, %118 : vector<12x256xf32>
    %123 = arith.addf %117, %122 : vector<12x256xf32>
    %124 = vector.broadcast %13 : vector<1x256xf32> to vector<12x256xf32>
    %125 = arith.mulf %123, %124 : vector<12x256xf32>
    %126 = arith.addf %104, %125 : vector<12x256xf32>
    %cst_67 = arith.constant 0.000000e+00 : f32
    %127 = vector.broadcast %cst_67 : f32 to vector<12x256xf32>
    %c1_68 = arith.constant 1 : index
    %c0_69 = arith.constant 0 : index
    %c0_70 = arith.constant 0 : index
    %128 = vector.load %arg2[%c1_68, %c0_69, %c0_70] : memref<9x12x1xf32, #tpu.memory_space<vmem>>, vector<1x12x1xf32>
    %129 = vector.shape_cast %128 : vector<1x12x1xf32> to vector<12x1xf32>
    %130 = vector.broadcast %129 : vector<12x1xf32> to vector<12x256xf32>
    %131 = arith.mulf %130, %99 : vector<12x256xf32>
    %132 = arith.addf %127, %131 : vector<12x256xf32>
    %c4_71 = arith.constant 4 : index
    %c0_72 = arith.constant 0 : index
    %c0_73 = arith.constant 0 : index
    %133 = vector.load %arg2[%c4_71, %c0_72, %c0_73] : memref<9x12x1xf32, #tpu.memory_space<vmem>>, vector<1x12x1xf32>
    %134 = vector.shape_cast %133 : vector<1x12x1xf32> to vector<12x1xf32>
    %135 = vector.broadcast %134 : vector<12x1xf32> to vector<12x256xf32>
    %136 = arith.mulf %135, %101 : vector<12x256xf32>
    %137 = arith.addf %132, %136 : vector<12x256xf32>
    %c7_74 = arith.constant 7 : index
    %c0_75 = arith.constant 0 : index
    %c0_76 = arith.constant 0 : index
    %138 = vector.load %arg2[%c7_74, %c0_75, %c0_76] : memref<9x12x1xf32, #tpu.memory_space<vmem>>, vector<1x12x1xf32>
    %139 = vector.shape_cast %138 : vector<1x12x1xf32> to vector<12x1xf32>
    %140 = vector.broadcast %139 : vector<12x1xf32> to vector<12x256xf32>
    %141 = arith.mulf %140, %103 : vector<12x256xf32>
    %142 = arith.addf %137, %141 : vector<12x256xf32>
    %143 = arith.addf %126, %142 : vector<12x256xf32>
    %cst_77 = arith.constant 0.000000e+00 : f32
    %144 = vector.broadcast %cst_77 : f32 to vector<12x256xf32>
    %c255_i32_78 = arith.constant 255 : i32
    %145 = tpu.dynamic_rotate %99 by %c255_i32_78 dim 1 : vector<12x256xf32>, i32 -> vector<12x256xf32>
    %c2_79 = arith.constant 2 : index
    %c0_80 = arith.constant 0 : index
    %c0_81 = arith.constant 0 : index
    %146 = vector.load %arg2[%c2_79, %c0_80, %c0_81] : memref<9x12x1xf32, #tpu.memory_space<vmem>>, vector<1x12x1xf32>
    %147 = vector.shape_cast %146 : vector<1x12x1xf32> to vector<12x1xf32>
    %148 = vector.broadcast %147 : vector<12x1xf32> to vector<12x256xf32>
    %149 = arith.mulf %148, %145 : vector<12x256xf32>
    %150 = arith.addf %144, %149 : vector<12x256xf32>
    %c255_i32_82 = arith.constant 255 : i32
    %151 = tpu.dynamic_rotate %101 by %c255_i32_82 dim 1 : vector<12x256xf32>, i32 -> vector<12x256xf32>
    %c5_83 = arith.constant 5 : index
    %c0_84 = arith.constant 0 : index
    %c0_85 = arith.constant 0 : index
    %152 = vector.load %arg2[%c5_83, %c0_84, %c0_85] : memref<9x12x1xf32, #tpu.memory_space<vmem>>, vector<1x12x1xf32>
    %153 = vector.shape_cast %152 : vector<1x12x1xf32> to vector<12x1xf32>
    %154 = vector.broadcast %153 : vector<12x1xf32> to vector<12x256xf32>
    %155 = arith.mulf %154, %151 : vector<12x256xf32>
    %156 = arith.addf %150, %155 : vector<12x256xf32>
    %c255_i32_86 = arith.constant 255 : i32
    %157 = tpu.dynamic_rotate %103 by %c255_i32_86 dim 1 : vector<12x256xf32>, i32 -> vector<12x256xf32>
    %c8_87 = arith.constant 8 : index
    %c0_88 = arith.constant 0 : index
    %c0_89 = arith.constant 0 : index
    %158 = vector.load %arg2[%c8_87, %c0_88, %c0_89] : memref<9x12x1xf32, #tpu.memory_space<vmem>>, vector<1x12x1xf32>
    %159 = vector.shape_cast %158 : vector<1x12x1xf32> to vector<12x1xf32>
    %160 = vector.broadcast %159 : vector<12x1xf32> to vector<12x256xf32>
    %161 = arith.mulf %160, %157 : vector<12x256xf32>
    %162 = arith.addf %156, %161 : vector<12x256xf32>
    %163 = vector.broadcast %24 : vector<1x256xf32> to vector<12x256xf32>
    %164 = arith.mulf %162, %163 : vector<12x256xf32>
    %165 = arith.addf %143, %164 : vector<12x256xf32>
    %c0_90 = arith.constant 0 : index
    %c0_91 = arith.constant 0 : index
    %166 = vector.load %arg3[%c0_90, %c0_91] : memref<12x12xf32, #tpu.memory_space<vmem>>, vector<12x12xf32>
    %cst_92 = arith.constant dense<0.000000e+00> : vector<12x256xf32>
    %167 = tpu.matmul %166, %165, %cst_92 {dimension_numbers = #tpu.dot_dimension_numbers<[1], [0], [0], [1], [0, 0, 1, 1], [], []>} : vector<12x12xf32>, vector<12x256xf32>, vector<12x256xf32> -> vector<12x256xf32>
    %c1_93 = arith.constant 1 : index
    %c0_94 = arith.constant 0 : index
    %c0_95 = arith.constant 0 : index
    %168 = vector.load %arg4[%c1_93, %c0_94, %c0_95] : memref<2x12x256xf32, #tpu.memory_space<vmem>>, vector<1x12x256xf32>
    %169 = vector.shape_cast %168 : vector<1x12x256xf32> to vector<12x256xf32>
    %170 = vector.shape_cast %167 : vector<12x256xf32> to vector<1x12x256xf32>
    tpu.vector_store %arg4[%c1_93, %c0_94, %c0_95], %170 {strides = array<i32>} : memref<2x12x256xf32, #tpu.memory_space<vmem>>, vector<1x12x256xf32>,
    return
  }
  func.func @transform_0(%arg0: i32) -> (i32, i32, i32) {
    %c0_i32 = arith.constant 0 : i32
    %c0_i32_0 = arith.constant 0 : i32
    %c0_i32_1 = arith.constant 0 : i32
    return %arg0, %c0_i32, %c0_i32_0 : i32, i32, i32
  }
  func.func @transform_1(%arg0: i32) -> (i32, i32, i32) {
    %c0_i32 = arith.constant 0 : i32
    %c0_i32_0 = arith.constant 0 : i32
    %c0_i32_1 = arith.constant 0 : i32
    %c0_i32_2 = arith.constant 0 : i32
    return %c0_i32, %c0_i32_0, %c0_i32_1 : i32, i32, i32
  }
  func.func @transform_2(%arg0: i32) -> (i32, i32) {
    %c0_i32 = arith.constant 0 : i32
    %c0_i32_0 = arith.constant 0 : i32
    %c0_i32_1 = arith.constant 0 : i32
    return %c0_i32, %c0_i32_0 : i32, i32
  }
  func.func @transform_3(%arg0: i32) -> (i32, i32, i32) {
    %c0_i32 = arith.constant 0 : i32
    %c0_i32_0 = arith.constant 0 : i32
    %c0_i32_1 = arith.constant 0 : i32
    return %arg0, %c0_i32, %c0_i32_0 : i32, i32, i32
  }
}

</mosaic_0001>

<llo_original>
// kernel: squeeze.2
$region0: #{squeeze.2}
  %s0 = inlined_call_operand.vmem [shape: f32[12,3,3], index: 0, kind: input, shape index: {}]
  %s1 = inlined_call_operand.vmem [shape: f32[12,9], index: 1, kind: output, shape index: {}]
  $region1: #{squeeze.2} parent=0
    #allocation0 [shape = 'u8[12288]{0}', space=vmem, size = 0x3000, scoped, tag = 'scoped mem for input reshape']
    %s3 = sshllo.u32 0, 4
    %s4 = smul.addr 4, 2
    %s5 = scalar_lea.vmem %s0, %s4
    %v6 = vld [vmem:[%s5] sm:%s3]
    %s7 = scalar_lea.vmem [#allocation0], 16
    %8 = vst [vmem:[%s7] sm:%s3] %v6
    %s9 = scalar_lea.vmem %s0, 4
    %v10 = vld [vmem:[%s9] sm:%s3]
    %s11 = scalar_lea.vmem [#allocation0], 8
    %12 = vst [vmem:[%s11] sm:%s3] %v10
    %v13 = vld [vmem:[%s0] sm:%s3]
    %14 = vst [vmem:[#allocation0] sm:%s3] %v13
    %v15 = vld [vmem:[#allocation0] sm:$0x7]
    %vm16 = vcmask 97280
    %17 = vst.msk [vmem:[%s1] sm:$0x7] %vm16, %v15
    %s18 = scalar_lea.vmem [#allocation0], 8
    %v19 = vld [vmem:[%s18] sm:$0x7]
    %vm20 = vcmask 97280
    %s21 = scalar_lea.vmem %s1, 3
    %22 = vst.msk [vmem:[%s21] sm:$0x7] %vm20, %v19
    %s23 = scalar_lea.vmem [#allocation0], 16
    %v24 = vld [vmem:[%s23] sm:$0x7]
    %vm25 = vcmask 97280
    %s26 = scalar_lea.vmem %s1, 6
    %27 = vst.msk [vmem:[%s26] sm:$0x7] %vm25, %v24

// kernel: squeeze.3
$region0: #{squeeze.3}
  %s0 = inlined_call_operand.vmem [shape: f32[12,2], index: 0, kind: input, shape index: {}]
  %s1 = inlined_call_operand.vmem [shape: f32[6,2,2], index: 1, kind: output, shape index: {}]
  $region1: #{squeeze.3} parent=0
    #allocation0 [shape = 'u8[4096]{0}', space=vmem, size = 0x1000, scoped, tag = 'scoped mem for input reshape']
    %s3 = sshllo.u32 0, 2
    %v4 = vld [vmem:[%s0] sm:%s3]
    %5 = vst [vmem:[#allocation0] sm:%s3] %v4
    %v6 = vld [vmem:[#allocation0] sm:$0x3]
    %vm7 = vcmask 15360
    %8 = vst.msk [vmem:[%s1] ss:$8 sm:$0x3] %vm7, %v6
    %v9 = vld [vmem:[#allocation0] sm:$0x3]
    %10 = vrot.lane.b32.xlu0 %v9, 126
    %v11 = vpop.permute.xlu0 %10
    %vm12 = vcmask 15360
    %s13 = scalar_lea.vmem %s1, 1
    %14 = vst.msk [vmem:[%s13] ss:$8 sm:$0x3] %vm12, %v11
    %v15 = vld [vmem:[#allocation0] sm:$0x3]
    %16 = vrot.lane.b32.xlu0 %v15, 124
    %v17 = vpop.permute.xlu0 %16
    %vm18 = vcmask 15360
    %s19 = scalar_lea.vmem %s1, 2
    %20 = vst.msk [vmem:[%s19] ss:$8 sm:$0x3] %vm18, %v17
    %v21 = vld [vmem:[#allocation0] sm:$0x3]
    %22 = vrot.lane.b32.xlu0 %v21, 122
    %v23 = vpop.permute.xlu0 %22
    %vm24 = vcmask 15360
    %s25 = scalar_lea.vmem %s1, 3
    %26 = vst.msk [vmem:[%s25] ss:$8 sm:$0x3] %vm24, %v23
    %v27 = vld [vmem:[#allocation0] sm:$0x3]
    %28 = vrot.lane.b32.xlu0 %v27, 120
    %v29 = vpop.permute.xlu0 %28
    %vm30 = vcmask 15360
    %s31 = scalar_lea.vmem %s1, 4
    %32 = vst.msk [vmem:[%s31] ss:$8 sm:$0x3] %vm30, %v29
    %v33 = vld [vmem:[#allocation0] sm:$0x3]
    %34 = vrot.lane.b32.xlu0 %v33, 118
    %v35 = vpop.permute.xlu0 %34
    %vm36 = vcmask 15360
    %s37 = scalar_lea.vmem %s1, 5
    %38 = vst.msk [vmem:[%s37] ss:$8 sm:$0x3] %vm36, %v35

// kernel: mla_projection.1
$region0: #{mla_projection.1}
  #allocation0 [shape = 'u32[]', space=smem, size = 0x4, offset = 0x4, fixed_abs, tag = 'smem constant byte address 0x4 - core index']
  #allocation1 [shape = 'u32[144,128]{1,0:T(1,128)}', space=vmem, size = 0x12000, scoped, tag = 'internal scratch']
  %s0 = inlined_call_operand.vmem [shape: f32[2,12,290], index: 0, kind: input, shape index: {}]
  %s1 = inlined_call_operand.vmem [shape: f32[9,12,1], index: 1, kind: input, shape index: {}]
  %s2 = inlined_call_operand.vmem [shape: f32[12,12], index: 2, kind: input, shape index: {}]
  %s3 = inlined_call_operand.vmem [shape: f32[2,12,256], index: 3, kind: output, shape index: {}]
  %s4 = sld [smem:[#allocation0]]
  $region22: #{mla_projection.1} parent=0
    _
  %s6 = ssub.s32 1, %s4
  %s7 = scalar_select 0, %s6, %s4
  // Predicated region
  $region2: #{mla_projection.1} parent=0 // pred_check
    _
  $region3: #{mla_projection.1} parent=0 // pred_check_branch
    %9 = sbr.rel (0) target = $region5
  $region4: #{mla_projection.1} parent=0 // pred_region
    _
  $region5: #{mla_projection.1} parent=0 // pred_fallthru
    _
  // Predicated region
  $region6: #{mla_projection.1} parent=0 // pred_check
    _
  $region7: #{mla_projection.1} parent=0 // pred_check_branch
    %11 = sbr.rel (0) target = $region9
  $region8: #{mla_projection.1} parent=0 // pred_region
    _
  $region9: #{mla_projection.1} parent=0 // pred_fallthru
    _
  // Predicated region
  $region10: #{mla_projection.1} parent=0 // pred_check
    _
  $region11: #{mla_projection.1} parent=0 // pred_check_branch
    %13 = sbr.rel (0) target = $region13
  $region12: #{mla_projection.1} parent=0 // pred_region
    _
  $region13: #{mla_projection.1} parent=0 // pred_fallthru
    _
  %v14 = vlaneseq
  %v15 = vand.u32 %v14, 127
  %v16 = vadd.s32 %v15, 128
  %vm17 = vcmp.lt.s32.totalorder %v15, 0
  %v18 = vsub.s32 0, %v15
  %v19 = vsel %vm17, %v18, %v15
  %v20 = vshrl.u32 %v19, 4
  %v21 = vand.u32 %v19, 15
  %v22 = vsub.s32 0, %v21
  %v23 = vsel %vm17, %v22, %v21
  %vm24 = vcmp.lt.s32.totalorder %v16, 0
  %v25 = vsub.s32 0, %v16
  %v26 = vsel %vm24, %v25, %v16
  %v27 = vshrl.u32 %v26, 4
  %v28 = vand.u32 %v26, 15
  %v29 = vsub.s32 0, %v28
  %v30 = vsel %vm24, %v29, %v28
  %v31 = vadd.s32 %v23, 4294967295
  %v32 = vadd.s32 %v30, 4294967295
  %vm33 = vcmp.ge.s32.totalorder %v31, 0
  %vm34 = vcmp.ge.s32.totalorder %v32, 0
  %vm35 = vcmp.lt.s32.totalorder %v31, 16
  %vm36 = vcmp.lt.s32.totalorder %v32, 16
  %vm37 = vmand %vm33, %vm35
  %vm38 = vmand %vm34, %vm36
  %v39 = vsel %vm37, 1, 0
  %v40 = vsel %vm38, 1, 0
  %v41 = vcvt.s32.f32 %v39
  %v42 = vcvt.s32.f32 %v40
  %v43 = vadd.s32 %v23, 1
  %v44 = vadd.s32 %v30, 1
  %vm45 = vcmp.ge.s32.totalorder %v43, 0
  %vm46 = vcmp.ge.s32.totalorder %v44, 0
  %vm47 = vcmp.lt.s32.totalorder %v43, 16
  %vm48 = vcmp.lt.s32.totalorder %v44, 16
  %vm49 = vmand %vm45, %vm47
  %vm50 = vmand %vm46, %vm48
  %v51 = vsel %vm49, 1, 0
  %v52 = vsel %vm50, 1, 0
  %v53 = vcvt.s32.f32 %v51
  %v54 = vcvt.s32.f32 %v52
  %v55 = vld [vmem:[%s0] sm:$0xff]
  %v56 = vld [vmem:[%s0 + $0x8] sm:$0xff]
  %v57 = vld [vmem:[%s0 + $0x10] sm:$0xff]
  %v58 = vld [vmem:[%s0 + $0x18] sm:$0xf]
  %v59 = vld [vmem:[%s0 + $0x20] sm:$0xf]
  %v60 = vld [vmem:[%s0 + $0x28] sm:$0xf]
  %67 = vrot.lane.b32.xlu0 %v55, 127
  %v68 = vpop.permute.xlu0 %67
  %69 = vrot.lane.b32.xlu0 %v56, 127
  %v70 = vpop.permute.xlu0 %69
  %71 = vrot.lane.b32.xlu0 %v57, 127
  %v72 = vpop.permute.xlu0 %71
  %73 = vrot.lane.b32.xlu0 %v58, 127
  %v74 = vpop.permute.xlu0 %73
  %75 = vrot.lane.b32.xlu0 %v59, 127
  %v76 = vpop.permute.xlu0 %75
  %77 = vrot.lane.b32.xlu0 %v60, 127
  %v78 = vpop.permute.xlu0 %77
  %vm79 = vcmask 1039360
  %v80 = vsel %vm79, %v68, %v70
  %v81 = vsel %vm79, %v70, %v72
  %v82 = vsel %vm79, %v74, %v76
  %v83 = vsel %vm79, %v76, %v78
  %88 = vrot.lane.b32.xlu0 %v80, 1
  %v89 = vpop.permute.xlu0 %88
  %90 = vrot.lane.b32.xlu0 %v82, 1
  %v91 = vpop.permute.xlu0 %90
  %92 = vrot.lane.b32.xlu0 %v81, 1
  %v93 = vpop.permute.xlu0 %92
  %94 = vrot.lane.b32.xlu0 %v83, 1
  %v95 = vpop.permute.xlu0 %94
  %vm96 = vcmp.lt.s32.totalorder %v15, 1
  %v97 = vsel %vm96, %v89, %v93
  %v98 = vsel %vm96, %v91, %v95
  %v99 = vsel %vm96, %v93, %v89
  %v100 = vsel %vm96, %v95, %v91
  %v101 = vld [vmem:[%s1] sm:$0xff]
  %v102 = vld [vmem:[%s1 + $0x8] sm:$0xf]
  %104 = vset.pattern.permute.xlu0 0
  %105 = vperm.xlu0 %104, %v101
  %v106 = vpop.permute.xlu0 %105
  %109 = vset.pattern.permute.xlu0 0
  %110 = vperm.xlu0 %109, %v102
  %v111 = vpop.permute.xlu0 %110
  %v113 = vmul.f32 %v106, %v99
  %v114 = vmul.f32 %v106, %v97
  %v115 = vmul.f32 %v111, %v100
  %v116 = vmul.f32 %v111, %v98
  %v117 = vadd.f32 %v113, 0.0
  %v118 = vadd.f32 %v114, 0.0
  %v119 = vadd.f32 %v115, 0.0
  %v120 = vadd.f32 %v116, 0.0
  %121 = vrot.lane.b32.xlu0 %v55, 111
  %v122 = vpop.permute.xlu0 %121
  %123 = vrot.lane.b32.xlu0 %v56, 111
  %v124 = vpop.permute.xlu0 %123
  %125 = vrot.lane.b32.xlu0 %v57, 111
  %v126 = vpop.permute.xlu0 %125
  %127 = vrot.lane.b32.xlu0 %v58, 111
  %v128 = vpop.permute.xlu0 %127
  %129 = vrot.lane.b32.xlu0 %v59, 111
  %v130 = vpop.permute.xlu0 %129
  %131 = vrot.lane.b32.xlu0 %v60, 111
  %v132 = vpop.permute.xlu0 %131
  %vm133 = vcmask 908288
  %v134 = vsel %vm133, %v122, %v124
  %v135 = vsel %vm133, %v124, %v126
  %v136 = vsel %vm133, %v128, %v130
  %v137 = vsel %vm133, %v130, %v132
  %142 = vrot.lane.b32.xlu0 %v134, 1
  %v143 = vpop.permute.xlu0 %142
  %144 = vrot.lane.b32.xlu0 %v136, 1
  %v145 = vpop.permute.xlu0 %144
  %146 = vrot.lane.b32.xlu0 %v135, 1
  %v147 = vpop.permute.xlu0 %146
  %148 = vrot.lane.b32.xlu0 %v137, 1
  %v149 = vpop.permute.xlu0 %148
  %v150 = vsel %vm96, %v143, %v147
  %v151 = vsel %vm96, %v145, %v149
  %v152 = vsel %vm96, %v147, %v143
  %v153 = vsel %vm96, %v149, %v145
  %s154 = scalar_lea.vmem %s1, 48
  %v155 = vld [vmem:[%s154] sm:$0xff]
  %v156 = vld [vmem:[%s154 + $0x8] sm:$0xf]
  %158 = vset.pattern.permute.xlu0 0
  %159 = vperm.xlu0 %158, %v155
  %v160 = vpop.permute.xlu0 %159
  %163 = vset.pattern.permute.xlu0 0
  %164 = vperm.xlu0 %163, %v156
  %v165 = vpop.permute.xlu0 %164
  %v167 = vmul.f32 %v160, %v152
  %v168 = vmul.f32 %v160, %v150
  %v169 = vmul.f32 %v165, %v153
  %v170 = vmul.f32 %v165, %v151
  %v171 = vadd.f32 %v117, %v167
  %v172 = vadd.f32 %v118, %v168
  %v173 = vadd.f32 %v119, %v169
  %v174 = vadd.f32 %v120, %v170
  %175 = vrot.lane.b32.xlu0 %v55, 95
  %v176 = vpop.permute.xlu0 %175
  %177 = vrot.lane.b32.xlu0 %v56, 95
  %v178 = vpop.permute.xlu0 %177
  %179 = vrot.lane.b32.xlu0 %v57, 95
  %v180 = vpop.permute.xlu0 %179
  %181 = vrot.lane.b32.xlu0 %v58, 95
  %v182 = vpop.permute.xlu0 %181
  %183 = vrot.lane.b32.xlu0 %v59, 95
  %v184 = vpop.permute.xlu0 %183
  %185 = vrot.lane.b32.xlu0 %v60, 95
  %v186 = vpop.permute.xlu0 %185
  %vm187 = vcmask 777216
  %v188 = vsel %vm187, %v176, %v178
  %v189 = vsel %vm187, %v178, %v180
  %v190 = vsel %vm187, %v182, %v184
  %v191 = vsel %vm187, %v184, %v186
  %196 = vrot.lane.b32.xlu0 %v188, 1
  %v197 = vpop.permute.xlu0 %196
  %198 = vrot.lane.b32.xlu0 %v190, 1
  %v199 = vpop.permute.xlu0 %198
  %200 = vrot.lane.b32.xlu0 %v189, 1
  %v201 = vpop.permute.xlu0 %200
  %202 = vrot.lane.b32.xlu0 %v191, 1
  %v203 = vpop.permute.xlu0 %202
  %v204 = vsel %vm96, %v197, %v201
  %v205 = vsel %vm96, %v199, %v203
  %v206 = vsel %vm96, %v201, %v197
  %v207 = vsel %vm96, %v203, %v199
  %s208 = scalar_lea.vmem %s1, 96
  %v209 = vld [vmem:[%s208] sm:$0xff]
  %v210 = vld [vmem:[%s208 + $0x8] sm:$0xf]
  %212 = vset.pattern.permute.xlu0 0
  %213 = vperm.xlu0 %212, %v209
  %v214 = vpop.permute.xlu0 %213
  %217 = vset.pattern.permute.xlu0 0
  %218 = vperm.xlu0 %217, %v210
  %v219 = vpop.permute.xlu0 %218
  %v221 = vmul.f32 %v214, %v206
  %v222 = vmul.f32 %v214, %v204
  %v223 = vmul.f32 %v219, %v207
  %v224 = vmul.f32 %v219, %v205
  %v225 = vadd.f32 %v171, %v221
  %v226 = vadd.f32 %v172, %v222
  %v227 = vadd.f32 %v173, %v223
  %v228 = vadd.f32 %v174, %v224
  %v229 = vmul.f32 %v225, %v41
  %v230 = vmul.f32 %v226, %v42
  %v231 = vmul.f32 %v227, %v41
  %v232 = vmul.f32 %v228, %v42
  %v233 = vadd.f32 %v229, 0.0
  %v234 = vadd.f32 %v230, 0.0
  %v235 = vadd.f32 %v231, 0.0
  %v236 = vadd.f32 %v232, 0.0
  %s237 = scalar_lea.vmem %s1, 16
  %v238 = vld [vmem:[%s237] sm:$0xff]
  %v239 = vld [vmem:[%s237 + $0x8] sm:$0xf]
  %241 = vset.pattern.permute.xlu0 0
  %242 = vperm.xlu0 %241, %v238
  %v243 = vpop.permute.xlu0 %242
  %246 = vset.pattern.permute.xlu0 0
  %247 = vperm.xlu0 %246, %v239
  %v248 = vpop.permute.xlu0 %247
  %v250 = vmul.f32 %v243, %v55
  %v251 = vmul.f32 %v243, %v56
  %v252 = vmul.f32 %v243, %v57
  %v253 = vmul.f32 %v248, %v58
  %v254 = vmul.f32 %v248, %v59
  %v255 = vmul.f32 %v248, %v60
  %v256 = vadd.f32 %v250, 0.0
  %v257 = vadd.f32 %v251, 0.0
  %v258 = vadd.f32 %v252, 0.0
  %v259 = vadd.f32 %v253, 0.0
  %v260 = vadd.f32 %v254, 0.0
  %v261 = vadd.f32 %v255, 0.0
  %s262 = scalar_lea.vmem %s1, 64
  %v263 = vld [vmem:[%s262] sm:$0xff]
  %v264 = vld [vmem:[%s262 + $0x8] sm:$0xf]
  %266 = vset.pattern.permute.xlu0 0
  %267 = vperm.xlu0 %266, %v263
  %v268 = vpop.permute.xlu0 %267
  %271 = vset.pattern.permute.xlu0 0
  %272 = vperm.xlu0 %271, %v264
  %v273 = vpop.permute.xlu0 %272
  %v275 = vmul.f32 %v268, %v55
  %v276 = vmul.f32 %v268, %v56
  %v277 = vmul.f32 %v268, %v57
  %v278 = vmul.f32 %v273, %v58
  %v279 = vmul.f32 %v273, %v59
  %v280 = vmul.f32 %v273, %v60
  %287 = vrot.lane.b32.xlu0 %v275, 112
  %v288 = vpop.permute.xlu0 %287
  %289 = vrot.lane.b32.xlu0 %v276, 112
  %v290 = vpop.permute.xlu0 %289
  %291 = vrot.lane.b32.xlu0 %v277, 112
  %v292 = vpop.permute.xlu0 %291
  %293 = vrot.lane.b32.xlu0 %v278, 112
  %v294 = vpop.permute.xlu0 %293
  %295 = vrot.lane.b32.xlu0 %v279, 112
  %v296 = vpop.permute.xlu0 %295
  %297 = vrot.lane.b32.xlu0 %v280, 112
  %v298 = vpop.permute.xlu0 %297
  %vm299 = vcmask 916480
  %v300 = vsel %vm299, %v288, %v290
  %v301 = vsel %vm299, %v290, %v292
  %v302 = vsel %vm299, %v294, %v296
  %v303 = vsel %vm299, %v296, %v298
  %v310 = vadd.f32 %v256, %v300
  %v311 = vadd.f32 %v257, %v301
  %v312 = vadd.f32 %v258, %v292
  %v313 = vadd.f32 %v259, %v302
  %v314 = vadd.f32 %v260, %v303
  %v315 = vadd.f32 %v261, %v298
  %s316 = scalar_lea.vmem %s1, 112
  %v317 = vld [vmem:[%s316] sm:$0xff]
  %v318 = vld [vmem:[%s316 + $0x8] sm:$0xf]
  %320 = vset.pattern.permute.xlu0 0
  %321 = vperm.xlu0 %320, %v317
  %v322 = vpop.permute.xlu0 %321
  %325 = vset.pattern.permute.xlu0 0
  %326 = vperm.xlu0 %325, %v318
  %v327 = vpop.permute.xlu0 %326
  %v329 = vmul.f32 %v322, %v55
  %v330 = vmul.f32 %v322, %v56
  %v331 = vmul.f32 %v322, %v57
  %v332 = vmul.f32 %v327, %v58
  %v333 = vmul.f32 %v327, %v59
  %v334 = vmul.f32 %v327, %v60
  %341 = vrot.lane.b32.xlu0 %v329, 96
  %v342 = vpop.permute.xlu0 %341
  %343 = vrot.lane.b32.xlu0 %v330, 96
  %v344 = vpop.permute.xlu0 %343
  %345 = vrot.lane.b32.xlu0 %v331, 96
  %v346 = vpop.permute.xlu0 %345
  %347 = vrot.lane.b32.xlu0 %v332, 96
  %v348 = vpop.permute.xlu0 %347
  %349 = vrot.lane.b32.xlu0 %v333, 96
  %v350 = vpop.permute.xlu0 %349
  %351 = vrot.lane.b32.xlu0 %v334, 96
  %v352 = vpop.permute.xlu0 %351
  %vm353 = vcmask 785408
  %v354 = vsel %vm353, %v342, %v344
  %v355 = vsel %vm353, %v344, %v346
  %v356 = vsel %vm353, %v348, %v350
  %v357 = vsel %vm353, %v350, %v352
  %v364 = vadd.f32 %v310, %v354
  %v365 = vadd.f32 %v311, %v355
  %v366 = vadd.f32 %v312, %v346
  %v367 = vadd.f32 %v313, %v356
  %v368 = vadd.f32 %v314, %v357
  %v369 = vadd.f32 %v315, %v352
  %376 = vrot.lane.b32.xlu0 %v364, 127
  %v377 = vpop.permute.xlu0 %376
  %378 = vrot.lane.b32.xlu0 %v365, 127
  %v379 = vpop.permute.xlu0 %378
  %380 = vrot.lane.b32.xlu0 %v366, 127
  %v381 = vpop.permute.xlu0 %380
  %382 = vrot.lane.b32.xlu0 %v367, 127
  %v383 = vpop.permute.xlu0 %382
  %384 = vrot.lane.b32.xlu0 %v368, 127
  %v385 = vpop.permute.xlu0 %384
  %386 = vrot.lane.b32.xlu0 %v369, 127
  %v387 = vpop.permute.xlu0 %386
  %v388 = vsel %vm79, %v377, %v379
  %v389 = vsel %vm79, %v379, %v381
  %v390 = vsel %vm79, %v383, %v385
  %v391 = vsel %vm79, %v385, %v387
  %v396 = vadd.f32 %v233, %v388
  %v397 = vadd.f32 %v234, %v389
  %v398 = vadd.f32 %v235, %v390
  %v399 = vadd.f32 %v236, %v391
  %400 = vrot.lane.b32.xlu0 %v80, 127
  %v401 = vpop.permute.xlu0 %400
  %402 = vrot.lane.b32.xlu0 %v82, 127
  %v403 = vpop.permute.xlu0 %402
  %404 = vrot.lane.b32.xlu0 %v81, 127
  %v405 = vpop.permute.xlu0 %404
  %406 = vrot.lane.b32.xlu0 %v83, 127
  %v407 = vpop.permute.xlu0 %406
  %vm408 = vcmp.lt.s32.totalorder %v15, 127
  %v409 = vsel %vm408, %v401, %v405
  %v410 = vsel %vm408, %v403, %v407
  %v411 = vsel %vm408, %v405, %v401
  %v412 = vsel %vm408, %v407, %v403
  %s413 = scalar_lea.vmem %s1, 32
  %v414 = vld [vmem:[%s413] sm:$0xff]
  %v415 = vld [vmem:[%s413 + $0x8] sm:$0xf]
  %417 = vset.pattern.permute.xlu0 0
  %418 = vperm.xlu0 %417, %v414
  %v419 = vpop.permute.xlu0 %418
  %422 = vset.pattern.permute.xlu0 0
  %423 = vperm.xlu0 %422, %v415
  %v424 = vpop.permute.xlu0 %423
  %v426 = vmul.f32 %v419, %v409
  %v427 = vmul.f32 %v419, %v411
  %v428 = vmul.f32 %v424, %v410
  %v429 = vmul.f32 %v424, %v412
  %v430 = vadd.f32 %v426, 0.0
  %v431 = vadd.f32 %v427, 0.0
  %v432 = vadd.f32 %v428, 0.0
  %v433 = vadd.f32 %v429, 0.0
  %434 = vrot.lane.b32.xlu0 %v134, 127
  %v435 = vpop.permute.xlu0 %434
  %436 = vrot.lane.b32.xlu0 %v136, 127
  %v437 = vpop.permute.xlu0 %436
  %438 = vrot.lane.b32.xlu0 %v135, 127
  %v439 = vpop.permute.xlu0 %438
  %440 = vrot.lane.b32.xlu0 %v137, 127
  %v441 = vpop.permute.xlu0 %440
  %v442 = vsel %vm408, %v435, %v439
  %v443 = vsel %vm408, %v437, %v441
  %v444 = vsel %vm408, %v439, %v435
  %v445 = vsel %vm408, %v441, %v437
  %s446 = scalar_lea.vmem %s1, 80
  %v447 = vld [vmem:[%s446] sm:$0xff]
  %v448 = vld [vmem:[%s446 + $0x8] sm:$0xf]
  %450 = vset.pattern.permute.xlu0 0
  %451 = vperm.xlu0 %450, %v447
  %v452 = vpop.permute.xlu0 %451
  %455 = vset.pattern.permute.xlu0 0
  %456 = vperm.xlu0 %455, %v448
  %v457 = vpop.permute.xlu0 %456
  %v459 = vmul.f32 %v452, %v442
  %v460 = vmul.f32 %v452, %v444
  %v461 = vmul.f32 %v457, %v443
  %v462 = vmul.f32 %v457, %v445
  %v463 = vadd.f32 %v430, %v459
  %v464 = vadd.f32 %v431, %v460
  %v465 = vadd.f32 %v432, %v461
  %v466 = vadd.f32 %v433, %v462
  %467 = vrot.lane.b32.xlu0 %v188, 127
  %v468 = vpop.permute.xlu0 %467
  %469 = vrot.lane.b32.xlu0 %v190, 127
  %v470 = vpop.permute.xlu0 %469
  %471 = vrot.lane.b32.xlu0 %v189, 127
  %v472 = vpop.permute.xlu0 %471
  %473 = vrot.lane.b32.xlu0 %v191, 127
  %v474 = vpop.permute.xlu0 %473
  %v475 = vsel %vm408, %v468, %v472
  %v476 = vsel %vm408, %v470, %v474
  %v477 = vsel %vm408, %v472, %v468
  %v478 = vsel %vm408, %v474, %v470
  %s479 = scalar_lea.vmem %s1, 128
  %v480 = vld [vmem:[%s479] sm:$0xff]
  %v481 = vld [vmem:[%s479 + $0x8] sm:$0xf]
  %483 = vset.pattern.permute.xlu0 0
  %484 = vperm.xlu0 %483, %v480
  %v485 = vpop.permute.xlu0 %484
  %488 = vset.pattern.permute.xlu0 0
  %489 = vperm.xlu0 %488, %v481
  %v490 = vpop.permute.xlu0 %489
  %v492 = vmul.f32 %v485, %v475
  %v493 = vmul.f32 %v485, %v477
  %v494 = vmul.f32 %v490, %v476
  %v495 = vmul.f32 %v490, %v478
  %v496 = vadd.f32 %v463, %v492
  %v497 = vadd.f32 %v464, %v493
  %v498 = vadd.f32 %v465, %v494
  %v499 = vadd.f32 %v466, %v495
  %v500 = vmul.f32 %v496, %v53
  %v501 = vmul.f32 %v497, %v54
  %v502 = vmul.f32 %v498, %v53
  %v503 = vmul.f32 %v499, %v54
  %v504 = vadd.f32 %v396, %v500
  %v505 = vadd.f32 %v397, %v501
  %v506 = vadd.f32 %v398, %v502
  %v507 = vadd.f32 %v399, %v503
  %v508 = vld [vmem:[%s2] sm:$0xff]
  %v509 = vld [vmem:[%s2 + $0x8] sm:$0xf]
  %vm510 = vcmask 97280
  %v512 = vsel %vm510, %v508, 0
  %v515 = vsel %vm510, %v509, 0
  %vm517 = vcmask 1043456
  %v519 = vsel %vm517, %v506, 0
  %v522 = vsel %vm517, %v507, 0
  %524 = vmatprep.subr.mxu0 %v505
  %525 = vmatpush1.msra.mxu0 %v504
  %526 = vmatprep.subr.mxu0 %v522
  %527 = vmatpush1.msra.mxu0 %v519
  %528 = vmatprep.subr.mxu0 0.0
  %529 = vmatpush1.msra.mxu0 0.0
  %530 = vmatprep.subr.mxu0 0.0
  %531 = vmatpush1.msra.mxu0 0.0
  %532 = vmatprep.subr.mxu0 0.0
  %533 = vmatpush1.msra.mxu0 0.0
  %534 = vmatprep.subr.mxu0 0.0
  %535 = vmatpush1.msra.mxu0 0.0
  %536 = vmatprep.subr.mxu0 0.0
  %537 = vmatpush1.msra.mxu0 0.0
  %538 = vmatprep.subr.mxu0 0.0
  %539 = vmatpush1.msra.mxu0 0.0
  %540 = vmatprep.subr.mxu0 0.0
  %541 = vmatpush1.msra.mxu0 0.0
  %542 = vmatprep.subr.mxu0 0.0
  %543 = vmatpush1.msra.mxu0 0.0
  %544 = vmatprep.subr.mxu0 0.0
  %545 = vmatpush1.msra.mxu0 0.0
  %546 = vmatprep.subr.mxu0 0.0
  %547 = vmatpush1.msra.mxu0 0.0
  %548 = vmatprep.subr.mxu0 0.0
  %549 = vmatpush1.msra.mxu0 0.0
  %550 = vmatprep.subr.mxu0 0.0
  %551 = vmatpush1.msra.mxu0 0.0
  %552 = vmatprep.subr.mxu0 0.0
  %553 = vmatpush1.msra.mxu0 0.0
  %554 = vmatprep.subr.mxu0 0.0
  %555 = vmatpush1.msra.mxu0 0.0
  %556 = vmatprep.subr.mxu0 0.0
  %557 = vmatpush1.msra.mxu0 0.0
  %558 = vmatprep.subr.mxu0 0.0
  %559 = vmatpush1.msra.mxu0 0.0
  %560 = vmatprep.subr.mxu0 0.0
  %561 = vmatpush1.msra.mxu0 0.0
  %562 = vmatprep.subr.mxu0 0.0
  %563 = vmatpush1.msra.mxu0 0.0
  %564 = vmatprep.subr.mxu0 0.0
  %565 = vmatpush1.msra.mxu0 0.0
  %566 = vmatprep.subr.mxu0 0.0
  %567 = vmatpush1.msra.mxu0 0.0
  %568 = vmatprep.subr.mxu0 0.0
  %569 = vmatpush1.msra.mxu0 0.0
  %570 = vmatprep.subr.mxu0 0.0
  %571 = vmatpush1.msra.mxu0 0.0
  %572 = vmatprep.subr.mxu0 0.0
  %573 = vmatpush1.msra.mxu0 0.0
  %574 = vmatprep.subr.mxu0 0.0
  %575 = vmatpush1.msra.mxu0 0.0
  %576 = vmatprep.subr.mxu0 0.0
  %577 = vmatpush1.msra.mxu0 0.0
  %578 = vmatprep.subr.mxu0 0.0
  %579 = vmatpush1.msra.mxu0 0.0
  %580 = vmatprep.subr.mxu0 0.0
  %581 = vmatpush1.msra.mxu0 0.0
  %582 = vmatprep.subr.mxu0 0.0
  %583 = vmatpush1.msra.mxu0 0.0
  %584 = vmatprep.subr.mxu0 0.0
  %585 = vmatpush1.msra.mxu0 0.0
  %586 = vmatprep.subr.mxu0 0.0
  %587 = vmatpush1.msra.mxu0 0.0
  %588 = vmatprep.mubr.f32.mxu0 0.0
  %589 = vmatmul.mubr.f32.gmra.mrb[0].mxu0 %v512
  %v590 = vpop.f32.mrb[0].mxu0
  %v591 = vadd.f32 0.0, %v590
  %v592 = vpop.f32.mrb[0].mxu0
  %v593 = vadd.f32 0.0, %v592
  %594 = vmatprep.mubr.f32.mxu0 0.0
  %595 = vmatmul.mubr.f32.gmra.mrb[0].mxu0 %v515
  %v596 = vpop.f32.mrb[0].mxu0
  %v597 = vadd.f32 0.0, %v596
  %v598 = vpop.f32.mrb[0].mxu0
  %v599 = vadd.f32 0.0, %v598
  %600 = vdwg.mxu0
  %601 = vst [vmem:[%s3] sm:$0xff] %v591
  %602 = vst [vmem:[%s3 + $0x8] sm:$0xff] %v593
  %603 = vst [vmem:[%s3 + $0x10] sm:$0xf] %v597
  %604 = vst [vmem:[%s3 + $0x18] sm:$0xf] %v599
  %s605 = scalar_lea.vmem %s0, 48
  %v606 = vld [vmem:[%s605] sm:$0xff]
  %v607 = vld [vmem:[%s605 + $0x8] sm:$0xff]
  %v608 = vld [vmem:[%s605 + $0x10] sm:$0xff]
  %v609 = vld [vmem:[%s605 + $0x18] sm:$0xf]
  %v610 = vld [vmem:[%s605 + $0x20] sm:$0xf]
  %v611 = vld [vmem:[%s605 + $0x28] sm:$0xf]
  %618 = vrot.lane.b32.xlu0 %v606, 127
  %v619 = vpop.permute.xlu0 %618
  %620 = vrot.lane.b32.xlu0 %v607, 127
  %v621 = vpop.permute.xlu0 %620
  %622 = vrot.lane.b32.xlu0 %v608, 127
  %v623 = vpop.permute.xlu0 %622
  %624 = vrot.lane.b32.xlu0 %v609, 127
  %v625 = vpop.permute.xlu0 %624
  %626 = vrot.lane.b32.xlu0 %v610, 127
  %v627 = vpop.permute.xlu0 %626
  %628 = vrot.lane.b32.xlu0 %v611, 127
  %v629 = vpop.permute.xlu0 %628
  %v630 = vsel %vm79, %v619, %v621
  %v631 = vsel %vm79, %v621, %v623
  %v632 = vsel %vm79, %v625, %v627
  %v633 = vsel %vm79, %v627, %v629
  %638 = vrot.lane.b32.xlu0 %v630, 1
  %v639 = vpop.permute.xlu0 %638
  %640 = vrot.lane.b32.xlu0 %v632, 1
  %v641 = vpop.permute.xlu0 %640
  %642 = vrot.lane.b32.xlu0 %v631, 1
  %v643 = vpop.permute.xlu0 %642
  %644 = vrot.lane.b32.xlu0 %v633, 1
  %v645 = vpop.permute.xlu0 %644
  %v646 = vsel %vm96, %v639, %v643
  %v647 = vsel %vm96, %v641, %v645
  %v648 = vsel %vm96, %v643, %v639
  %v649 = vsel %vm96, %v645, %v641
  %v650 = vld [vmem:[%s1] sm:$0xff]
  %v651 = vld [vmem:[%s1 + $0x8] sm:$0xf]
  %653 = vset.pattern.permute.xlu0 0
  %654 = vperm.xlu0 %653, %v650
  %v655 = vpop.permute.xlu0 %654
  %658 = vset.pattern.permute.xlu0 0
  %659 = vperm.xlu0 %658, %v651
  %v660 = vpop.permute.xlu0 %659
  %v662 = vmul.f32 %v655, %v648
  %v663 = vmul.f32 %v655, %v646
  %v664 = vmul.f32 %v660, %v649
  %v665 = vmul.f32 %v660, %v647
  %v666 = vadd.f32 %v662, 0.0
  %v667 = vadd.f32 %v663, 0.0
  %v668 = vadd.f32 %v664, 0.0
  %v669 = vadd.f32 %v665, 0.0
  %670 = vrot.lane.b32.xlu0 %v606, 111
  %v671 = vpop.permute.xlu0 %670
  %672 = vrot.lane.b32.xlu0 %v607, 111
  %v673 = vpop.permute.xlu0 %672
  %674 = vrot.lane.b32.xlu0 %v608, 111
  %v675 = vpop.permute.xlu0 %674
  %676 = vrot.lane.b32.xlu0 %v609, 111
  %v677 = vpop.permute.xlu0 %676
  %678 = vrot.lane.b32.xlu0 %v610, 111
  %v679 = vpop.permute.xlu0 %678
  %680 = vrot.lane.b32.xlu0 %v611, 111
  %v681 = vpop.permute.xlu0 %680
  %v682 = vsel %vm133, %v671, %v673
  %v683 = vsel %vm133, %v673, %v675
  %v684 = vsel %vm133, %v677, %v679
  %v685 = vsel %vm133, %v679, %v681
  %690 = vrot.lane.b32.xlu0 %v682, 1
  %v691 = vpop.permute.xlu0 %690
  %692 = vrot.lane.b32.xlu0 %v684, 1
  %v693 = vpop.permute.xlu0 %692
  %694 = vrot.lane.b32.xlu0 %v683, 1
  %v695 = vpop.permute.xlu0 %694
  %696 = vrot.lane.b32.xlu0 %v685, 1
  %v697 = vpop.permute.xlu0 %696
  %v698 = vsel %vm96, %v691, %v695
  %v699 = vsel %vm96, %v693, %v697
  %v700 = vsel %vm96, %v695, %v691
  %v701 = vsel %vm96, %v697, %v693
  %v702 = vld [vmem:[%s154] sm:$0xff]
  %v703 = vld [vmem:[%s154 + $0x8] sm:$0xf]
  %705 = vset.pattern.permute.xlu0 0
  %706 = vperm.xlu0 %705, %v702
  %v707 = vpop.permute.xlu0 %706
  %710 = vset.pattern.permute.xlu0 0
  %711 = vperm.xlu0 %710, %v703
  %v712 = vpop.permute.xlu0 %711
  %v714 = vmul.f32 %v707, %v700
  %v715 = vmul.f32 %v707, %v698
  %v716 = vmul.f32 %v712, %v701
  %v717 = vmul.f32 %v712, %v699
  %v718 = vadd.f32 %v666, %v714
  %v719 = vadd.f32 %v667, %v715
  %v720 = vadd.f32 %v668, %v716
  %v721 = vadd.f32 %v669, %v717
  %722 = vrot.lane.b32.xlu0 %v606, 95
  %v723 = vpop.permute.xlu0 %722
  %724 = vrot.lane.b32.xlu0 %v607, 95
  %v725 = vpop.permute.xlu0 %724
  %726 = vrot.lane.b32.xlu0 %v608, 95
  %v727 = vpop.permute.xlu0 %726
  %728 = vrot.lane.b32.xlu0 %v609, 95
  %v729 = vpop.permute.xlu0 %728
  %730 = vrot.lane.b32.xlu0 %v610, 95
  %v731 = vpop.permute.xlu0 %730
  %732 = vrot.lane.b32.xlu0 %v611, 95
  %v733 = vpop.permute.xlu0 %732
  %v734 = vsel %vm187, %v723, %v725
  %v735 = vsel %vm187, %v725, %v727
  %v736 = vsel %vm187, %v729, %v731
  %v737 = vsel %vm187, %v731, %v733
  %742 = vrot.lane.b32.xlu0 %v734, 1
  %v743 = vpop.permute.xlu0 %742
  %744 = vrot.lane.b32.xlu0 %v736, 1
  %v745 = vpop.permute.xlu0 %744
  %746 = vrot.lane.b32.xlu0 %v735, 1
  %v747 = vpop.permute.xlu0 %746
  %748 = vrot.lane.b32.xlu0 %v737, 1
  %v749 = vpop.permute.xlu0 %748
  %v750 = vsel %vm96, %v743, %v747
  %v751 = vsel %vm96, %v745, %v749
  %v752 = vsel %vm96, %v747, %v743
  %v753 = vsel %vm96, %v749, %v745
  %v754 = vld [vmem:[%s208] sm:$0xff]
  %v755 = vld [vmem:[%s208 + $0x8] sm:$0xf]
  %757 = vset.pattern.permute.xlu0 0
  %758 = vperm.xlu0 %757, %v754
  %v759 = vpop.permute.xlu0 %758
  %762 = vset.pattern.permute.xlu0 0
  %763 = vperm.xlu0 %762, %v755
  %v764 = vpop.permute.xlu0 %763
  %v766 = vmul.f32 %v759, %v752
  %v767 = vmul.f32 %v759, %v750
  %v768 = vmul.f32 %v764, %v753
  %v769 = vmul.f32 %v764, %v751
  %v770 = vadd.f32 %v718, %v766
  %v771 = vadd.f32 %v719, %v767
  %v772 = vadd.f32 %v720, %v768
  %v773 = vadd.f32 %v721, %v769
  %v774 = vmul.f32 %v770, %v41
  %v775 = vmul.f32 %v771, %v42
  %v776 = vmul.f32 %v772, %v41
  %v777 = vmul.f32 %v773, %v42
  %v778 = vadd.f32 %v774, 0.0
  %v779 = vadd.f32 %v775, 0.0
  %v780 = vadd.f32 %v776, 0.0
  %v781 = vadd.f32 %v777, 0.0
  %v782 = vld [vmem:[%s237] sm:$0xff]
  %v783 = vld [vmem:[%s237 + $0x8] sm:$0xf]
  %785 = vset.pattern.permute.xlu0 0
  %786 = vperm.xlu0 %785, %v782
  %v787 = vpop.permute.xlu0 %786
  %790 = vset.pattern.permute.xlu0 0
  %791 = vperm.xlu0 %790, %v783
  %v792 = vpop.permute.xlu0 %791
  %v794 = vmul.f32 %v787, %v606
  %v795 = vmul.f32 %v787, %v607
  %v796 = vmul.f32 %v787, %v608
  %v797 = vmul.f32 %v792, %v609
  %v798 = vmul.f32 %v792, %v610
  %v799 = vmul.f32 %v792, %v611
  %v800 = vadd.f32 %v794, 0.0
  %v801 = vadd.f32 %v795, 0.0
  %v802 = vadd.f32 %v796, 0.0
  %v803 = vadd.f32 %v797, 0.0
  %v804 = vadd.f32 %v798, 0.0
  %v805 = vadd.f32 %v799, 0.0
  %v806 = vld [vmem:[%s262] sm:$0xff]
  %v807 = vld [vmem:[%s262 + $0x8] sm:$0xf]
  %809 = vset.pattern.permute.xlu0 0
  %810 = vperm.xlu0 %809, %v806
  %v811 = vpop.permute.xlu0 %810
  %814 = vset.pattern.permute.xlu0 0
  %815 = vperm.xlu0 %814, %v807
  %v816 = vpop.permute.xlu0 %815
  %v818 = vmul.f32 %v811, %v606
  %v819 = vmul.f32 %v811, %v607
  %v820 = vmul.f32 %v811, %v608
  %v821 = vmul.f32 %v816, %v609
  %v822 = vmul.f32 %v816, %v610
  %v823 = vmul.f32 %v816, %v611
  %830 = vrot.lane.b32.xlu0 %v818, 112
  %v831 = vpop.permute.xlu0 %830
  %832 = vrot.lane.b32.xlu0 %v819, 112
  %v833 = vpop.permute.xlu0 %832
  %834 = vrot.lane.b32.xlu0 %v820, 112
  %v835 = vpop.permute.xlu0 %834
  %836 = vrot.lane.b32.xlu0 %v821, 112
  %v837 = vpop.permute.xlu0 %836
  %838 = vrot.lane.b32.xlu0 %v822, 112
  %v839 = vpop.permute.xlu0 %838
  %840 = vrot.lane.b32.xlu0 %v823, 112
  %v841 = vpop.permute.xlu0 %840
  %v842 = vsel %vm299, %v831, %v833
  %v843 = vsel %vm299, %v833, %v835
  %v844 = vsel %vm299, %v837, %v839
  %v845 = vsel %vm299, %v839, %v841
  %v852 = vadd.f32 %v800, %v842
  %v853 = vadd.f32 %v801, %v843
  %v854 = vadd.f32 %v802, %v835
  %v855 = vadd.f32 %v803, %v844
  %v856 = vadd.f32 %v804, %v845
  %v857 = vadd.f32 %v805, %v841
  %v858 = vld [vmem:[%s316] sm:$0xff]
  %v859 = vld [vmem:[%s316 + $0x8] sm:$0xf]
  %861 = vset.pattern.permute.xlu0 0
  %862 = vperm.xlu0 %861, %v858
  %v863 = vpop.permute.xlu0 %862
  %866 = vset.pattern.permute.xlu0 0
  %867 = vperm.xlu0 %866, %v859
  %v868 = vpop.permute.xlu0 %867
  %v870 = vmul.f32 %v863, %v606
  %v871 = vmul.f32 %v863, %v607
  %v872 = vmul.f32 %v863, %v608
  %v873 = vmul.f32 %v868, %v609
  %v874 = vmul.f32 %v868, %v610
  %v875 = vmul.f32 %v868, %v611
  %882 = vrot.lane.b32.xlu0 %v870, 96
  %v883 = vpop.permute.xlu0 %882
  %884 = vrot.lane.b32.xlu0 %v871, 96
  %v885 = vpop.permute.xlu0 %884
  %886 = vrot.lane.b32.xlu0 %v872, 96
  %v887 = vpop.permute.xlu0 %886
  %888 = vrot.lane.b32.xlu0 %v873, 96
  %v889 = vpop.permute.xlu0 %888
  %890 = vrot.lane.b32.xlu0 %v874, 96
  %v891 = vpop.permute.xlu0 %890
  %892 = vrot.lane.b32.xlu0 %v875, 96
  %v893 = vpop.permute.xlu0 %892
  %v894 = vsel %vm353, %v883, %v885
  %v895 = vsel %vm353, %v885, %v887
  %v896 = vsel %vm353, %v889, %v891
  %v897 = vsel %vm353, %v891, %v893
  %v904 = vadd.f32 %v852, %v894
  %v905 = vadd.f32 %v853, %v895
  %v906 = vadd.f32 %v854, %v887
  %v907 = vadd.f32 %v855, %v896
  %v908 = vadd.f32 %v856, %v897
  %v909 = vadd.f32 %v857, %v893
  %916 = vrot.lane.b32.xlu0 %v904, 127
  %v917 = vpop.permute.xlu0 %916
  %918 = vrot.lane.b32.xlu0 %v905, 127
  %v919 = vpop.permute.xlu0 %918
  %920 = vrot.lane.b32.xlu0 %v906, 127
  %v921 = vpop.permute.xlu0 %920
  %922 = vrot.lane.b32.xlu0 %v907, 127
  %v923 = vpop.permute.xlu0 %922
  %924 = vrot.lane.b32.xlu0 %v908, 127
  %v925 = vpop.permute.xlu0 %924
  %926 = vrot.lane.b32.xlu0 %v909, 127
  %v927 = vpop.permute.xlu0 %926
  %v928 = vsel %vm79, %v917, %v919
  %v929 = vsel %vm79, %v919, %v921
  %v930 = vsel %vm79, %v923, %v925
  %v931 = vsel %vm79, %v925, %v927
  %v936 = vadd.f32 %v778, %v928
  %v937 = vadd.f32 %v779, %v929
  %v938 = vadd.f32 %v780, %v930
  %v939 = vadd.f32 %v781, %v931
  %940 = vrot.lane.b32.xlu0 %v630, 127
  %v941 = vpop.permute.xlu0 %940
  %942 = vrot.lane.b32.xlu0 %v632, 127
  %v943 = vpop.permute.xlu0 %942
  %944 = vrot.lane.b32.xlu0 %v631, 127
  %v945 = vpop.permute.xlu0 %944
  %946 = vrot.lane.b32.xlu0 %v633, 127
  %v947 = vpop.permute.xlu0 %946
  %v948 = vsel %vm408, %v941, %v945
  %v949 = vsel %vm408, %v943, %v947
  %v950 = vsel %vm408, %v945, %v941
  %v951 = vsel %vm408, %v947, %v943
  %v952 = vld [vmem:[%s413] sm:$0xff]
  %v953 = vld [vmem:[%s413 + $0x8] sm:$0xf]
  %955 = vset.pattern.permute.xlu0 0
  %956 = vperm.xlu0 %955, %v952
  %v957 = vpop.permute.xlu0 %956
  %960 = vset.pattern.permute.xlu0 0
  %961 = vperm.xlu0 %960, %v953
  %v962 = vpop.permute.xlu0 %961
  %v964 = vmul.f32 %v957, %v948
  %v965 = vmul.f32 %v957, %v950
  %v966 = vmul.f32 %v962, %v949
  %v967 = vmul.f32 %v962, %v951
  %v968 = vadd.f32 %v964, 0.0
  %v969 = vadd.f32 %v965, 0.0
  %v970 = vadd.f32 %v966, 0.0
  %v971 = vadd.f32 %v967, 0.0
  %972 = vrot.lane.b32.xlu0 %v682, 127
  %v973 = vpop.permute.xlu0 %972
  %974 = vrot.lane.b32.xlu0 %v684, 127
  %v975 = vpop.permute.xlu0 %974
  %976 = vrot.lane.b32.xlu0 %v683, 127
  %v977 = vpop.permute.xlu0 %976
  %978 = vrot.lane.b32.xlu0 %v685, 127
  %v979 = vpop.permute.xlu0 %978
  %v980 = vsel %vm408, %v973, %v977
  %v981 = vsel %vm408, %v975, %v979
  %v982 = vsel %vm408, %v977, %v973
  %v983 = vsel %vm408, %v979, %v975
  %v984 = vld [vmem:[%s446] sm:$0xff]
  %v985 = vld [vmem:[%s446 + $0x8] sm:$0xf]
  %987 = vset.pattern.permute.xlu0 0
  %988 = vperm.xlu0 %987, %v984
  %v989 = vpop.permute.xlu0 %988
  %992 = vset.pattern.permute.xlu0 0
  %993 = vperm.xlu0 %992, %v985
  %v994 = vpop.permute.xlu0 %993
  %v996 = vmul.f32 %v989, %v980
  %v997 = vmul.f32 %v989, %v982
  %v998 = vmul.f32 %v994, %v981
  %v999 = vmul.f32 %v994, %v983
  %v1000 = vadd.f32 %v968, %v996
  %v1001 = vadd.f32 %v969, %v997
  %v1002 = vadd.f32 %v970, %v998
  %v1003 = vadd.f32 %v971, %v999
  %1004 = vrot.lane.b32.xlu0 %v734, 127
  %v1005 = vpop.permute.xlu0 %1004
  %1006 = vrot.lane.b32.xlu0 %v736, 127
  %v1007 = vpop.permute.xlu0 %1006
  %1008 = vrot.lane.b32.xlu0 %v735, 127
  %v1009 = vpop.permute.xlu0 %1008
  %1010 = vrot.lane.b32.xlu0 %v737, 127
  %v1011 = vpop.permute.xlu0 %1010
  %v1012 = vsel %vm408, %v1005, %v1009
  %v1013 = vsel %vm408, %v1007, %v1011
  %v1014 = vsel %vm408, %v1009, %v1005
  %v1015 = vsel %vm408, %v1011, %v1007
  %v1016 = vld [vmem:[%s479] sm:$0xff]
  %v1017 = vld [vmem:[%s479 + $0x8] sm:$0xf]
  %1019 = vset.pattern.permute.xlu0 0
  %1020 = vperm.xlu0 %1019, %v1016
  %v1021 = vpop.permute.xlu0 %1020
  %1024 = vset.pattern.permute.xlu0 0
  %1025 = vperm.xlu0 %1024, %v1017
  %v1026 = vpop.permute.xlu0 %1025
  %v1028 = vmul.f32 %v1021, %v1012
  %v1029 = vmul.f32 %v1021, %v1014
  %v1030 = vmul.f32 %v1026, %v1013
  %v1031 = vmul.f32 %v1026, %v1015
  %v1032 = vadd.f32 %v1000, %v1028
  %v1033 = vadd.f32 %v1001, %v1029
  %v1034 = vadd.f32 %v1002, %v1030
  %v1035 = vadd.f32 %v1003, %v1031
  %v1036 = vmul.f32 %v1032, %v53
  %v1037 = vmul.f32 %v1033, %v54
  %v1038 = vmul.f32 %v1034, %v53
  %v1039 = vmul.f32 %v1035, %v54
  %v1040 = vadd.f32 %v936, %v1036
  %v1041 = vadd.f32 %v937, %v1037
  %v1042 = vadd.f32 %v938, %v1038
  %v1043 = vadd.f32 %v939, %v1039
  %v1044 = vld [vmem:[%s2] sm:$0xff]
  %v1045 = vld [vmem:[%s2 + $0x8] sm:$0xf]
  %v1047 = vsel %vm510, %v1044, 0
  %v1050 = vsel %vm510, %v1045, 0
  %v1053 = vsel %vm517, %v1042, 0
  %v1056 = vsel %vm517, %v1043, 0
  %1058 = vmatprep.subr.mxu0 %v1041
  %1059 = vmatpush1.msra.mxu0 %v1040
  %1060 = vmatprep.subr.mxu0 %v1056
  %1061 = vmatpush1.msra.mxu0 %v1053
  %1062 = vmatprep.subr.mxu0 0.0
  %1063 = vmatpush1.msra.mxu0 0.0
  %1064 = vmatprep.subr.mxu0 0.0
  %1065 = vmatpush1.msra.mxu0 0.0
  %1066 = vmatprep.subr.mxu0 0.0
  %1067 = vmatpush1.msra.mxu0 0.0
  %1068 = vmatprep.subr.mxu0 0.0
  %1069 = vmatpush1.msra.mxu0 0.0
  %1070 = vmatprep.subr.mxu0 0.0
  %1071 = vmatpush1.msra.mxu0 0.0
  %1072 = vmatprep.subr.mxu0 0.0
  %1073 = vmatpush1.msra.mxu0 0.0
  %1074 = vmatprep.subr.mxu0 0.0
  %1075 = vmatpush1.msra.mxu0 0.0
  %1076 = vmatprep.subr.mxu0 0.0
  %1077 = vmatpush1.msra.mxu0 0.0
  %1078 = vmatprep.subr.mxu0 0.0
  %1079 = vmatpush1.msra.mxu0 0.0
  %1080 = vmatprep.subr.mxu0 0.0
  %1081 = vmatpush1.msra.mxu0 0.0
  %1082 = vmatprep.subr.mxu0 0.0
  %1083 = vmatpush1.msra.mxu0 0.0
  %1084 = vmatprep.subr.mxu0 0.0
  %1085 = vmatpush1.msra.mxu0 0.0
  %1086 = vmatprep.subr.mxu0 0.0
  %1087 = vmatpush1.msra.mxu0 0.0
  %1088 = vmatprep.subr.mxu0 0.0
  %1089 = vmatpush1.msra.mxu0 0.0
  %1090 = vmatprep.subr.mxu0 0.0
  %1091 = vmatpush1.msra.mxu0 0.0
  %1092 = vmatprep.subr.mxu0 0.0
  %1093 = vmatpush1.msra.mxu0 0.0
  %1094 = vmatprep.subr.mxu0 0.0
  %1095 = vmatpush1.msra.mxu0 0.0
  %1096 = vmatprep.subr.mxu0 0.0
  %1097 = vmatpush1.msra.mxu0 0.0
  %1098 = vmatprep.subr.mxu0 0.0
  %1099 = vmatpush1.msra.mxu0 0.0
  %1100 = vmatprep.subr.mxu0 0.0
  %1101 = vmatpush1.msra.mxu0 0.0
  %1102 = vmatprep.subr.mxu0 0.0
  %1103 = vmatpush1.msra.mxu0 0.0
  %1104 = vmatprep.subr.mxu0 0.0
  %1105 = vmatpush1.msra.mxu0 0.0
  %1106 = vmatprep.subr.mxu0 0.0
  %1107 = vmatpush1.msra.mxu0 0.0
  %1108 = vmatprep.subr.mxu0 0.0
  %1109 = vmatpush1.msra.mxu0 0.0
  %1110 = vmatprep.subr.mxu0 0.0
  %1111 = vmatpush1.msra.mxu0 0.0
  %1112 = vmatprep.subr.mxu0 0.0
  %1113 = vmatpush1.msra.mxu0 0.0
  %1114 = vmatprep.subr.mxu0 0.0
  %1115 = vmatpush1.msra.mxu0 0.0
  %1116 = vmatprep.subr.mxu0 0.0
  %1117 = vmatpush1.msra.mxu0 0.0
  %1118 = vmatprep.subr.mxu0 0.0
  %1119 = vmatpush1.msra.mxu0 0.0
  %1120 = vmatprep.subr.mxu0 0.0
  %1121 = vmatpush1.msra.mxu0 0.0
  %1122 = vmatprep.mubr.f32.mxu0 0.0
  %1123 = vmatmul.mubr.f32.gmra.mrb[0].mxu0 %v1047
  %v1124 = vpop.f32.mrb[0].mxu0
  %v1125 = vadd.f32 0.0, %v1124
  %v1126 = vpop.f32.mrb[0].mxu0
  %v1127 = vadd.f32 0.0, %v1126
  %1128 = vmatprep.mubr.f32.mxu0 0.0
  %1129 = vmatmul.mubr.f32.gmra.mrb[0].mxu0 %v1050
  %v1130 = vpop.f32.mrb[0].mxu0
  %v1131 = vadd.f32 0.0, %v1130
  %v1132 = vpop.f32.mrb[0].mxu0
  %v1133 = vadd.f32 0.0, %v1132
  %1134 = vdwg.mxu0
  %s1135 = scalar_lea.vmem %s3, 32
  %1136 = vst [vmem:[%s1135] sm:$0xff] %v1125
  %1137 = vst [vmem:[%s1135 + $0x8] sm:$0xff] %v1127
  %1138 = vst [vmem:[%s1135 + $0x10] sm:$0xf] %v1131
  %1139 = vst [vmem:[%s1135 + $0x18] sm:$0xf] %v1133
  // Predicated region
  $region14: #{mla_projection.1} parent=0 // pred_check
    _
  $region15: #{mla_projection.1} parent=0 // pred_check_branch
    %1141 = sbr.rel (0) target = $region17
  $region16: #{mla_projection.1} parent=0 // pred_region
    _
  $region17: #{mla_projection.1} parent=0 // pred_fallthru
    _
  // Predicated region
  $region18: #{mla_projection.1} parent=0 // pred_check
    _
  $region19: #{mla_projection.1} parent=0 // pred_check_branch
    %1143 = sbr.rel (0) target = $region21
  $region20: #{mla_projection.1} parent=0 // pred_region
    _
  $region21: #{mla_projection.1} parent=0 // pred_fallthru
    _

</llo_original>
